<compile_context>
chip_gen: v7x
topology: tpu7x:2x2x1
jax: 0.10.0
libtpu: 0.0.40
codegen_flags: <defaults>
</compile_context>

<pallas_src>
import math
import functools

import jax
import jax.numpy as jnp
from jax import lax
from jax.experimental import pallas as pl
from jax.experimental.pallas import tpu as pltpu

_LANE = 128


def _round_up(x, m):
    return ((x + m - 1) // m) * m


def _cdiv(a, b):
    return (a + b - 1) // b


# ----------------------------------------------------------------------------
# Kernels
# ----------------------------------------------------------------------------
def _linear_kernel_fullk(x_ref, wt_ref, b_ref, o_ref):
    # x_ref: (tm, Kp)  wt_ref: (Kp, tn)  b_ref: (1, tn)  o_ref: (tm, tn)
    acc = jnp.dot(x_ref[...], wt_ref[...], preferred_element_type=jnp.float32)
    o_ref[...] = (acc + b_ref[...].astype(jnp.float32)).astype(o_ref.dtype)


def _linear_kernel_blockk(x_ref, wt_ref, b_ref, o_ref, acc_ref):
    # x_ref: (tm, tk)  wt_ref: (tk, tn)  b_ref: (1, tn)
    # o_ref: (tm, tn)  acc_ref: (tm, tn) f32 scratch
    k = pl.program_id(2)

    @pl.when(k == 0)
    def _():
        acc_ref[...] = jnp.zeros_like(acc_ref)

    acc_ref[...] += jnp.dot(
        x_ref[...], wt_ref[...], preferred_element_type=jnp.float32
    )

    @pl.when(k == pl.num_programs(2) - 1)
    def _():
        o_ref[...] = (acc_ref[...] + b_ref[...].astype(jnp.float32)).astype(
            o_ref.dtype
        )


# ----------------------------------------------------------------------------
# Tile selection
# ----------------------------------------------------------------------------
def _choose_tiles(M, N, K, in_itemsize, out_itemsize, budget):
    """Return (tm, tn, tk, Kp, full_k)."""
    sub = 16 if in_itemsize == 2 else 8
    Mr = _round_up(M, sub)
    Nr = _round_up(N, _LANE)
    Kp0 = _round_up(K, _LANE)

    tm = min(512, Mr)
    tn = min(512, Nr)

    # Megacore (v7x has 2 TCs): keep >=2 blocks on the parallel axes if possible.
    if _cdiv(Mr, tm) == 1 and _cdiv(Nr, tn) == 1 and Nr >= 2 * _LANE:
        tn = _round_up(_cdiv(Nr, 2), _LANE)

    def fp(tm_, tn_, tk_, with_acc):
        # double-buffered X / W^T / bias tiles + double-buffered output tile
        b = 2 * (tm_ * tk_ + tk_ * tn_ + tn_) * in_itemsize
        b += 2 * tm_ * tn_ * out_itemsize
        if with_acc:
            b += tm_ * tn_ * 4
        return b

    # Path 1: whole K slab per (i, j) tile -> no K grid axis, no acc scratch.
    if fp(tm, tn, Kp0, False) <= budget:
        return tm, tn, Kp0, Kp0, True

    # Path 2: blocked K with resident f32 accumulator.
    tk = min(Kp0, 2048)
    for _ in range(16):
        if fp(tm, tn, tk, True) <= budget:
            break
        if tk >= 2 * _LANE:
            tk = _round_up(tk // 2, _LANE)
        elif tn > _LANE:
            tn = _round_up(tn // 2, _LANE)
        elif tm > sub:
            tm = max(_round_up(tm // 2, sub), sub)
        else:
            break

    # Spread K evenly over the k blocks so padding stays minimal and tk | Kp.
    nk = _cdiv(Kp0, tk)
    tk = _round_up(_cdiv(Kp0, nk), _LANE)
    Kp = nk * tk
    return tm, tn, tk, Kp, False


# ----------------------------------------------------------------------------
# Wrapper
# ----------------------------------------------------------------------------
@functools.partial(jax.jit, static_argnames=("compute_dtype", "vmem_budget_bytes"))
def lipschitz_linear_forward(
    x, weight, bias, *, compute_dtype=None, vmem_budget_bytes=32 << 20
):
    """y = x @ weight.T + bias computed with a tiled Pallas TPU kernel.

    x:      (..., in_features)
    weight: (out_features, in_features)
    bias:   (out_features,)
    compute_dtype: optionally cast x/weight (e.g. jnp.bfloat16) before the
        MXU; the accumulator stays f32 and the output keeps x.dtype.
    """
    lead = x.shape[:-1]
    K = x.shape[-1]
    N, K2 = weight.shape
    assert K == K2, "in_features mismatch"
    assert bias.shape == (N,)

    out_dtype = x.dtype
    x2 = x.reshape(-1, K)
    M = x2.shape[0]

    if compute_dtype is not None:
        x2 = x2.astype(compute_dtype)
        weight = weight.astype(compute_dtype)

    in_itemsize = jnp.dtype(x2.dtype).itemsize
    out_itemsize = jnp.dtype(out_dtype).itemsize

    tm, tn, tk, Kp, full_k = _choose_tiles(
        M, N, K, in_itemsize, out_itemsize, vmem_budget_bytes
    )

    # Pre-transpose W once: stream lane-dense (tk, tn) tiles of W^T so the
    # kernel does a plain M,K @ K,N dot (no in-kernel transpose feeding MXU).
    wt = weight.T  # (K, N)

    # Only the reduction axis needs zero-fill for correctness.  M / N edges
    # are handled by masked partial blocks (cdiv grid).
    if Kp != K:
        x2 = jnp.pad(x2, ((0, 0), (0, Kp - K)))
        wt = jnp.pad(wt, ((0, Kp - K), (0, 0)))
    bias2d = bias.reshape(1, N)

    grid_m = _cdiv(M, tm)
    grid_n = _cdiv(N, tn)
    grid_k = 1 if full_k else Kp // tk

    # Real streamed traffic: X re-read per j block, W^T re-read per i block.
    bytes_accessed = (
        grid_n * M * Kp * in_itemsize
        + grid_m * Kp * N * in_itemsize
        + M * N * out_itemsize
        + N * out_itemsize
    )
    cost = pl.CostEstimate(
        flops=2 * M * N * Kp, transcendentals=0, bytes_accessed=bytes_accessed
    )

    if full_k:
        grid = (grid_m, grid_n)
        in_specs = [
            pl.BlockSpec((tm, Kp), lambda i, j: (i, 0)),   # X slab
            pl.BlockSpec((Kp, tn), lambda i, j: (0, j)),   # W^T slab
            pl.BlockSpec((1, tn), lambda i, j: (0, j)),    # bias row
        ]
        out_specs = pl.BlockSpec((tm, tn), lambda i, j: (i, j))
        scratch = []
        kernel = _linear_kernel_fullk
        semantics = ("parallel", "parallel")
        footprint = (
            2 * (tm * Kp + Kp * tn + tn) * in_itemsize
            + 2 * tm * tn * out_itemsize
        )
    else:
        grid = (grid_m, grid_n, grid_k)
        in_specs = [
            pl.BlockSpec((tm, tk), lambda i, j, k: (i, k)),  # X tile
            pl.BlockSpec((tk, tn), lambda i, j, k: (k, j)),  # W^T tile
            pl.BlockSpec((1, tn), lambda i, j, k: (0, j)),   # bias row
        ]
        out_specs = pl.BlockSpec((tm, tn), lambda i, j, k: (i, j))
        scratch = [pltpu.VMEM((tm, tn), jnp.float32)]
        kernel = _linear_kernel_blockk
        semantics = ("parallel", "parallel", "arbitrary")
        footprint = (
            2 * (tm * tk + tk * tn + tn) * in_itemsize
            + 2 * tm * tn * out_itemsize
            + tm * tn * 4
        )

    # Actual footprint + 25% margin (Mosaic internal scratch), capped at
    # 48 MiB so it is always valid on v7x (64 MiB physical VMEM per TC).
    vmem_limit = int(min(48 << 20, max(footprint + (footprint >> 2) + (2 << 20),
                                       8 << 20)))

    out = pl.pallas_call(
        kernel,
        out_shape=jax.ShapeDtypeStruct((M, N), out_dtype),
        grid_spec=pltpu.PrefetchScalarGridSpec(
            num_scalar_prefetch=0,
            grid=grid,
            in_specs=in_specs,
            out_specs=out_specs,
            scratch_shapes=scratch,
        ),
        compiler_params=pltpu.CompilerParams(
            dimension_semantics=semantics,
            vmem_limit_bytes=vmem_limit,
        ),
        cost_estimate=cost,
    )(x2, wt, bias2d)

    return out.reshape(lead + (N,))


# ----------------------------------------------------------------------------
# Parameter init matching the reference module's reset_parameters()
# ----------------------------------------------------------------------------
def init_params(key, in_features, out_features, dtype=jnp.float32):
    """kaiming_uniform_(a=sqrt(5)) for W, uniform(-1/sqrt(fan_in), ...) for b."""
    kw, kb = jax.random.split(key)
    fan_in = in_features
    w_bound = math.sqrt(6.0 / ((1.0 + 5.0) * fan_in))
    weight = jax.random.uniform(
        kw, (out_features, in_features), dtype, minval=-w_bound, maxval=w_bound
    )
    b_bound = 1.0 / math.sqrt(fan_in)
    bias = jax.random.uniform(
        kb, (out_features,), dtype, minval=-b_bound, maxval=b_bound
    )
    return weight, bias


if __name__ == "__main__":
    key = jax.random.PRNGKey(0)
    kx, kp, kx2, kp2, kx3, kp3 = jax.random.split(key, 6)

    # 1) Small, module-consistent shapes (full-K path).
    batch, in_features, out_features = 8, 32, 32
    x = jax.random.normal(kx, (batch, in_features), dtype=jnp.float32)
    weight, bias = init_params(kp, in_features, out_features)

    y = jax.block_until_ready(lipschitz_linear_forward(x, weight, bias))
    y_ref = x @ weight.T + bias[None, :]
    assert y.shape == (batch, out_features)
    assert jnp.allclose(y, y_ref, atol=1e-5, rtol=1e-5), "mismatch vs reference"

    # 2) Ragged M / N / K (exercise masked edge blocks; only K is zero-padded).
    M2, K2, N2 = 10, 48, 20
    x2 = jax.random.normal(kx2, (M2, K2), dtype=jnp.float32)
    w2, b2 = init_params(kp2, K2, N2)
    y2 = jax.block_until_ready(lipschitz_linear_forward(x2, w2, b2))
    y2_ref = x2 @ w2.T + b2[None, :]
    assert y2.shape == (M2, N2)
    assert jnp.allclose(y2, y2_ref, atol=1e-5, rtol=1e-5), "mismatch (ragged)"

    # 3) Blocked-K path (forced by a small VMEM budget) at a larger shape.
    M3, K3, N3 = 128, 1024, 256
    x3 = jax.random.normal(kx3, (M3, K3), dtype=jnp.float32)
    w3, b3 = init_params(kp3, K3, N3)
    y3 = jax.block_until_ready(
        lipschitz_linear_forward(x3, w3, b3, vmem_budget_bytes=1 << 20)
    )
    y3_ref = (
        lax.dot_general(
            x3, w3, (((1,), (1,)), ((), ())), precision=lax.Precision.HIGHEST
        )
        + b3[None, :]
    )
    assert y3.shape == (M3, N3)
    assert jnp.allclose(y3, y3_ref, atol=2e-2, rtol=2e-2), "mismatch (blocked-K)"

    # 4) Optional bf16 operand path (f32 accumulator, f32 output).
    yb = jax.block_until_ready(
        lipschitz_linear_forward(x, weight, bias, compute_dtype=jnp.bfloat16)
    )
    yb_ref = (
        x.astype(jnp.bfloat16).astype(jnp.float32)
        @ weight.astype(jnp.bfloat16).astype(jnp.float32).T
        + bias[None, :]
    )
    assert yb.shape == (batch, out_features)
    assert jnp.allclose(yb, yb_ref, atol=1e-4, rtol=1e-4), "mismatch (bf16)"

    print("KERNEL_OK")
</pallas_src>

<mosaic_0001>
module attributes {stable_mosaic.version = 11 : i64} {
  func.func @_linear_kernel_fullk(%arg0: i32, %arg1: i32, %arg2: memref<8x128xf32, #tpu.memory_space<vmem>>, %arg3: memref<128x128xf32, #tpu.memory_space<vmem>>, %arg4: memref<1x128xf32, #tpu.memory_space<vmem>>, %arg5: memref<8x128xf32, #tpu.memory_space<vmem>>) attributes {dimension_semantics = [#tpu.dimension_semantics<parallel>, #tpu.dimension_semantics<parallel>], iteration_bounds = array<i64: 1, 1>, scalar_prefetch = 0 : i64, scratch_operands = 0 : i64, tpu.core_type = #tpu.core_type<tc>, window_params = [{transform_indices = @transform_0, window_bounds = array<i64: 8, 128>}, {transform_indices = @transform_1, window_bounds = array<i64: 128, 128>}, {transform_indices = @transform_2, window_bounds = array<i64: 1, 128>}, {transform_indices = @transform_3, window_bounds = array<i64: 8, 128>}]} {
    %c0 = arith.constant 0 : index
    %c0_0 = arith.constant 0 : index
    %0 = vector.load %arg2[%c0, %c0_0] : memref<8x128xf32, #tpu.memory_space<vmem>>, vector<8x128xf32>
    %c0_1 = arith.constant 0 : index
    %c0_2 = arith.constant 0 : index
    %1 = vector.load %arg3[%c0_1, %c0_2] : memref<128x128xf32, #tpu.memory_space<vmem>>, vector<128x128xf32>
    %cst = arith.constant dense<0.000000e+00> : vector<8x128xf32>
    %2 = tpu.matmul %0, %1, %cst {dimension_numbers = #tpu.dot_dimension_numbers<[1], [0], [0], [1], [0, 0, 1, 1], [], []>} : vector<8x128xf32>, vector<128x128xf32>, vector<8x128xf32> -> vector<8x128xf32>
    %c0_3 = arith.constant 0 : index
    %c0_4 = arith.constant 0 : index
    %3 = vector.load %arg4[%c0_3, %c0_4] : memref<1x128xf32, #tpu.memory_space<vmem>>, vector<1x128xf32>
    %4 = vector.broadcast %3 : vector<1x128xf32> to vector<8x128xf32>
    %5 = arith.addf %2, %4 : vector<8x128xf32>
    %c0_5 = arith.constant 0 : index
    %c0_6 = arith.constant 0 : index
    %6 = vector.load %arg5[%c0_5, %c0_6] : memref<8x128xf32, #tpu.memory_space<vmem>>, vector<8x128xf32>
    tpu.vector_store %arg5[%c0_5, %c0_6], %5 {strides = array<i32>} : memref<8x128xf32, #tpu.memory_space<vmem>>, vector<8x128xf32>,
    return
  }
  func.func @transform_0(%arg0: i32, %arg1: i32) -> (i32, i32) {
    %c0_i32 = arith.constant 0 : i32
    %c0_i32_0 = arith.constant 0 : i32
    return %arg0, %c0_i32 : i32, i32
  }
  func.func @transform_1(%arg0: i32, %arg1: i32) -> (i32, i32) {
    %c0_i32 = arith.constant 0 : i32
    %c0_i32_0 = arith.constant 0 : i32
    return %c0_i32, %arg1 : i32, i32
  }
  func.func @transform_2(%arg0: i32, %arg1: i32) -> (i32, i32) {
    %c0_i32 = arith.constant 0 : i32
    %c0_i32_0 = arith.constant 0 : i32
    return %c0_i32, %arg1 : i32, i32
  }
  func.func @transform_3(%arg0: i32, %arg1: i32) -> (i32, i32) {
    %c0_i32 = arith.constant 0 : i32
    return %arg0, %arg1 : i32, i32
  }
}

</mosaic_0001>

<llo_original>
// kernel: lipschitz_linear_forward.1
$region0: #{lipschitz_linear_forward.1}
  #allocation0 [shape = 'u32[]', space=smem, size = 0x4, offset = 0x4, fixed_abs, tag = 'smem constant byte address 0x4 - core index']
  #allocation1 [shape = 'u32[144,128]{1,0:T(1,128)}', space=vmem, size = 0x12000, scoped, tag = 'internal scratch']
  %s0 = inlined_call_operand.vmem [shape: f32[8,128], index: 0, kind: input, shape index: {}]
  %s1 = inlined_call_operand.vmem [shape: f32[128,32], index: 1, kind: input, shape index: {}]
  %s2 = inlined_call_operand.vmem [shape: f32[1,32], index: 2, kind: input, shape index: {}]
  %s3 = inlined_call_operand.hbm [shape: f32[8,32], index: 3, kind: output, shape index: {}]
  %s4 = sld [smem:[#allocation0]]
  $region22: #{lipschitz_linear_forward.1} parent=0
    _
  %s6 = ssub.s32 1, %s4
  %s7 = scalar_select 0, %s6, %s4
  $region1: #{lipschitz_linear_forward.1} parent=0
    #allocation2 [shape = 'u8[4096]{0}', space=vmem, size = 0x1000, scoped, tag = 'output window, operand 0, single buffered']
    #allocation3 [shape = 's32[1]{0}', space=sflag, size = 0x4, scoped, tag = 'scoped memory for lipschitz_linear_forward.1']
    %8 = vsyncpa [#allocation3], 0
    // Predicated region
    $region2: #{lipschitz_linear_forward.1} parent=1 // pred_check
      _
    $region3: #{lipschitz_linear_forward.1} parent=1 // pred_check_branch
      %10 = sbr.rel (0) target = $region5
    $region4: #{lipschitz_linear_forward.1} parent=1 // pred_region
      _
    $region5: #{lipschitz_linear_forward.1} parent=1 // pred_fallthru
      _
    // Predicated region
    $region6: #{lipschitz_linear_forward.1} parent=1 // pred_check
      _
    $region7: #{lipschitz_linear_forward.1} parent=1 // pred_check_branch
      %12 = sbr.rel (0) target = $region9
    $region8: #{lipschitz_linear_forward.1} parent=1 // pred_region
      _
    $region9: #{lipschitz_linear_forward.1} parent=1 // pred_fallthru
      _
    // Predicated region
    $region10: #{lipschitz_linear_forward.1} parent=1 // pred_check
      _
    $region11: #{lipschitz_linear_forward.1} parent=1 // pred_check_branch
      %14 = sbr.rel (0) target = $region13
    $region12: #{lipschitz_linear_forward.1} parent=1 // pred_region
      _
    $region13: #{lipschitz_linear_forward.1} parent=1 // pred_fallthru
      _
    %v15 = vld [vmem:[%s0] sm:$0xff]
    %v16 = vld [vmem:[%s1] sm:$0xff]
    %v17 = vld [vmem:[%s1 + $0x8] sm:$0xff]
    %v18 = vld [vmem:[%s1 + $0x10] sm:$0xff]
    %v19 = vld [vmem:[%s1 + $0x18] sm:$0xff]
    %v20 = vld [vmem:[%s1 + $0x20] sm:$0xff]
    %v21 = vld [vmem:[%s1 + $0x28] sm:$0xff]
    %v22 = vld [vmem:[%s1 + $0x30] sm:$0xff]
    %v23 = vld [vmem:[%s1 + $0x38] sm:$0xff]
    %v24 = vld [vmem:[%s1 + $0x40] sm:$0xff]
    %v25 = vld [vmem:[%s1 + $0x48] sm:$0xff]
    %v26 = vld [vmem:[%s1 + $0x50] sm:$0xff]
    %v27 = vld [vmem:[%s1 + $0x58] sm:$0xff]
    %v28 = vld [vmem:[%s1 + $0x60] sm:$0xff]
    %v29 = vld [vmem:[%s1 + $0x68] sm:$0xff]
    %v30 = vld [vmem:[%s1 + $0x70] sm:$0xff]
    %v31 = vld [vmem:[%s1 + $0x78] sm:$0xff]
    %v32 = vld [vmem:[%s2] sm:$0x1]
    %v34 = vlaneseq
    %v35 = vshrl.u32 %v34, 7
    %v36 = vsub.s32 0, %v35
    %v37 = vrot.slane %v32, %v36
    %39 = vmatprep.subr.mxu0 0.0
    %40 = vmatpush1.msra.mxu0 %v16
    %41 = vmatprep.subr.mxu0 0.0
    %42 = vmatpush1.msra.mxu0 %v17
    %43 = vmatprep.subr.mxu0 0.0
    %44 = vmatpush1.msra.mxu0 %v18
    %45 = vmatprep.subr.mxu0 0.0
    %46 = vmatpush1.msra.mxu0 %v19
    %47 = vmatprep.subr.mxu0 0.0
    %48 = vmatpush1.msra.mxu0 %v20
    %49 = vmatprep.subr.mxu0 0.0
    %50 = vmatpush1.msra.mxu0 %v21
    %51 = vmatprep.subr.mxu0 0.0
    %52 = vmatpush1.msra.mxu0 %v22
    %53 = vmatprep.subr.mxu0 0.0
    %54 = vmatpush1.msra.mxu0 %v23
    %55 = vmatprep.subr.mxu0 0.0
    %56 = vmatpush1.msra.mxu0 %v24
    %57 = vmatprep.subr.mxu0 0.0
    %58 = vmatpush1.msra.mxu0 %v25
    %59 = vmatprep.subr.mxu0 0.0
    %60 = vmatpush1.msra.mxu0 %v26
    %61 = vmatprep.subr.mxu0 0.0
    %62 = vmatpush1.msra.mxu0 %v27
    %63 = vmatprep.subr.mxu0 0.0
    %64 = vmatpush1.msra.mxu0 %v28
    %65 = vmatprep.subr.mxu0 0.0
    %66 = vmatpush1.msra.mxu0 %v29
    %67 = vmatprep.subr.mxu0 0.0
    %68 = vmatpush1.msra.mxu0 %v30
    %69 = vmatprep.subr.mxu0 0.0
    %70 = vmatpush1.msra.mxu0 %v31
    %71 = vmatprep.subr.mxu0 0.0
    %72 = vmatpush1.msra.mxu0 0.0
    %73 = vmatprep.subr.mxu0 0.0
    %74 = vmatpush1.msra.mxu0 0.0
    %75 = vmatprep.subr.mxu0 0.0
    %76 = vmatpush1.msra.mxu0 0.0
    %77 = vmatprep.subr.mxu0 0.0
    %78 = vmatpush1.msra.mxu0 0.0
    %79 = vmatprep.subr.mxu0 0.0
    %80 = vmatpush1.msra.mxu0 0.0
    %81 = vmatprep.subr.mxu0 0.0
    %82 = vmatpush1.msra.mxu0 0.0
    %83 = vmatprep.subr.mxu0 0.0
    %84 = vmatpush1.msra.mxu0 0.0
    %85 = vmatprep.subr.mxu0 0.0
    %86 = vmatpush1.msra.mxu0 0.0
    %87 = vmatprep.subr.mxu0 0.0
    %88 = vmatpush1.msra.mxu0 0.0
    %89 = vmatprep.subr.mxu0 0.0
    %90 = vmatpush1.msra.mxu0 0.0
    %91 = vmatprep.subr.mxu0 0.0
    %92 = vmatpush1.msra.mxu0 0.0
    %93 = vmatprep.subr.mxu0 0.0
    %94 = vmatpush1.msra.mxu0 0.0
    %95 = vmatprep.subr.mxu0 0.0
    %96 = vmatpush1.msra.mxu0 0.0
    %97 = vmatprep.subr.mxu0 0.0
    %98 = vmatpush1.msra.mxu0 0.0
    %99 = vmatprep.subr.mxu0 0.0
    %100 = vmatpush1.msra.mxu0 0.0
    %101 = vmatprep.subr.mxu0 0.0
    %102 = vmatpush1.msra.mxu0 0.0
    %103 = vmatprep.mubr.f32.mxu0 0.0
    %104 = vmatmul.mubr.f32.gmra.mrb[0].mxu0 %v15
    %v105 = vpop.f32.mrb[0].mxu0
    %v106 = vadd.f32 %v37, %v105
    %v107 = vpop.f32.mrb[0].mxu0
    %108 = vdwg.mxu0
    %109 = vst [vmem:[#allocation2] sm:$0xff] %v106
    // Predicated region
    $region14: #{lipschitz_linear_forward.1} parent=1 // pred_check
      _
    $region15: #{lipschitz_linear_forward.1} parent=1 // pred_check_branch
      %111 = sbr.rel (0) target = $region17
    $region16: #{lipschitz_linear_forward.1} parent=1 // pred_region
      %s113 = ssub.s32 128, 128
      %114 = vsyncadd [#allocation3], %s113
      %s116 = sshll.u32 [#allocation2], 4
      %s117 = int_to_ptr.vmem [resolvable:$true] %s116
      %119 = dma.vmem_to_hbm [thread:$0]  %s117, 128, %s3, [#allocation3]
    $region17: #{lipschitz_linear_forward.1} parent=1 // pred_fallthru
      _
    // Predicated region
    $region18: #{lipschitz_linear_forward.1} parent=1 // pred_check
      _
    $region19: #{lipschitz_linear_forward.1} parent=1 // pred_check_branch
      %121 = sbr.rel (0) target = $region21
    $region20: #{lipschitz_linear_forward.1} parent=1 // pred_region
      %122 = dma.done [#allocation3], 128
    $region21: #{lipschitz_linear_forward.1} parent=1 // pred_fallthru
      _
    %123 = vsyncpa [#allocation3], 1

</llo_original>
